<compile_context>
chip_gen: v5e
topology: v5e:2x2
jax: 0.10.0
libtpu: 0.0.40
codegen_flags: <defaults>
</compile_context>

<pallas_src>
import math
import functools

import jax
import jax.numpy as jnp
from jax.experimental import pallas as pl
from jax.experimental.pallas import tpu as pltpu


# ----------------------------------------------------------------------------
# Kernels
# ----------------------------------------------------------------------------
def _rowdense_kernel(x_ref, t_ref, b_ref, o_ref, *, KH, stride, Ho, scale):
    """Small-channel path.

    x_ref: (Nb, Hp, Wp*Cin)        padded input rows, channels innermost
    t_ref: (KH, Wp*Cin, Wo*Cout)   zero-scattered (width-Toeplitz) weight
    b_ref: (1, Wo*Cout)            bias tiled across output columns
    o_ref: (Nb, Ho, Wo*Cout)       lane-dense output block
    """
    Nb = x_ref.shape[0]
    WpC = x_ref.shape[2]
    WoC = o_ref.shape[2]

    acc = jnp.zeros((Nb * Ho, WoC), jnp.float32)
    if stride == 1:
        for kh in range(KH):  # static unroll; KH is tiny
            rows = x_ref[:, pl.ds(kh, Ho), :]
            acc += jnp.dot(rows.reshape(Nb * Ho, WpC), t_ref[kh],
                           preferred_element_type=jnp.float32)
    else:
        x = x_ref[...]
        for kh in range(KH):
            rows = jax.lax.slice(
                x, (0, kh, 0), (Nb, kh + (Ho - 1) * stride + 1, WpC),
                (1, stride, 1))
            acc += jnp.dot(rows.reshape(Nb * Ho, WpC), t_ref[kh],
                           preferred_element_type=jnp.float32)

    # Equalized-lr scale folded into the epilogue, fused with the bias add.
    acc = acc * jnp.float32(scale) + b_ref[...].astype(jnp.float32)
    o_ref[...] = acc.reshape(Nb, Ho, WoC).astype(o_ref.dtype)


def _channels_kernel(x_ref, w_ref, b_ref, o_ref, *, KH, KW, stride, Ho, Wo, scale):
    """Large-channel fallback (contraction K = Cin per tap; good once Cin >= 128).

    x_ref: (Nb, Hp, Wp, Cin)  NHWC padded input block
    w_ref: (KH, KW, Cin, Cout)
    b_ref: (1, Cout)
    o_ref: (Nb, Ho*Wo, Cout)
    """
    Nb, _, _, Cin = x_ref.shape
    Cout = o_ref.shape[2]
    x = x_ref[...]

    acc = jnp.zeros((Nb * Ho * Wo, Cout), jnp.float32)
    for kh in range(KH):
        for kw in range(KW):
            xs = jax.lax.slice(
                x, (0, kh, kw, 0),
                (Nb, kh + (Ho - 1) * stride + 1, kw + (Wo - 1) * stride + 1, Cin),
                (1, stride, stride, 1))
            acc += jnp.dot(xs.reshape(Nb * Ho * Wo, Cin), w_ref[kh, kw],
                           preferred_element_type=jnp.float32)

    acc = acc * jnp.float32(scale) + b_ref[...].astype(jnp.float32)
    o_ref[...] = acc.reshape(Nb, Ho * Wo, Cout).astype(o_ref.dtype)


# ----------------------------------------------------------------------------
# Wrapper
# ----------------------------------------------------------------------------
def _pick_batch_block(n, per_item_bytes, budget_bytes):
    """Largest divisor of n whose blocks fit the VMEM budget (>=1)."""
    nb = 1
    for cand in range(2, n + 1):
        if n % cand == 0 and cand * per_item_bytes <= budget_bytes:
            nb = cand
    return nb


def equal_conv2d(x_nchw, weight, bias=None, *, stride=1, padding=0,
                 block_vmem_budget=8 * 1024 * 1024):
    """EqualConv2d forward. x_nchw: (N,Cin,H,W); weight: (Cout,Cin,KH,KW); bias: (Cout,) or None."""
    N, Cin, H, W = x_nchw.shape
    Cout, Cin_w, KH, KW = weight.shape
    assert Cin == Cin_w
    scale = 1.0 / math.sqrt(Cin * KH * KW)

    Ho = (H + 2 * padding - KH) // stride + 1
    Wo = (W + 2 * padding - KW) // stride + 1
    Hp, Wp = H + 2 * padding, W + 2 * padding

    dtype = x_nchw.dtype
    isz = jnp.dtype(dtype).itemsize

    # Layout plumbing (one-time, wrapper-side): NCHW -> NHWC + spatial zero-pad.
    x = jnp.transpose(x_nchw, (0, 2, 3, 1))
    if padding:
        x = jnp.pad(x, ((0, 0), (padding, padding), (padding, padding), (0, 0)))

    bias_vec = jnp.zeros((Cout,), dtype) if bias is None else bias.astype(dtype)

    vmem_limit = 48 * 1024 * 1024  # fits v5e/v6e/v7x physical VMEM with headroom

    # Toeplitz operator size decides the strategy: it is cheap exactly in the
    # small-channel / small-width regime where per-tap K=Cin matmuls waste the MXU.
    t_bytes = KH * (Wp * Cin) * (Wo * Cout) * isz
    use_rowdense = t_bytes <= 2 * 1024 * 1024

    if use_rowdense:
        # ---- row-dense path -------------------------------------------------
        xr = x.reshape(N, Hp, Wp * Cin)  # channels folded into the lane dim

        # Scatter the weight once into T[kh] (Wp*Cin, Wo*Cout):
        #   T[kh][wp*Cin+ci, wo*Cout+co] = w[co,ci,kh,wp-wo*stride]  (0 elsewhere)
        w_t = jnp.transpose(weight, (2, 3, 1, 0)).astype(dtype)       # (KH,KW,Cin,Cout)
        vals = jnp.broadcast_to(w_t.reshape(KH, 1, KW * Cin, Cout),
                                (KH, Wo, KW * Cin, Cout))
        rows_idx = (jnp.arange(Wo)[:, None, None] * (stride * Cin)
                    + jnp.arange(KW * Cin)[None, :, None])            # (Wo, KW*Cin, 1)
        cols_idx = (jnp.arange(Wo)[:, None, None] * Cout
                    + jnp.arange(Cout)[None, None, :])                # (Wo, 1, Cout)
        T = jnp.zeros((KH, Wp * Cin, Wo * Cout), dtype).at[:, rows_idx, cols_idx].set(vals)
        bias_row = jnp.tile(bias_vec, Wo).reshape(1, Wo * Cout)

        resident = t_bytes + Wo * Cout * isz
        per_image = (2 * Hp * (Wp * Cin) + 2 * Ho * (Wo * Cout)) * isz + Ho * Wo * Cout * 4
        Nb = _pick_batch_block(N, per_image, max(block_vmem_budget - resident, per_image))

        kernel = functools.partial(_rowdense_kernel, KH=KH, stride=stride, Ho=Ho, scale=scale)
        out = pl.pallas_call(
            kernel,
            out_shape=jax.ShapeDtypeStruct((N, Ho, Wo * Cout), dtype),
            grid_spec=pltpu.PrefetchScalarGridSpec(
                num_scalar_prefetch=0,
                grid=(N // Nb,),
                in_specs=[
                    pl.BlockSpec((Nb, Hp, Wp * Cin), lambda b: (b, 0, 0)),
                    # Weight & bias: whole-array VMEM residents (single copy,
                    # not part of the double-buffered pipeline).
                    pl.BlockSpec(memory_space=pltpu.MemorySpace.VMEM),
                    pl.BlockSpec(memory_space=pltpu.MemorySpace.VMEM),
                ],
                out_specs=pl.BlockSpec((Nb, Ho, Wo * Cout), lambda b: (b, 0, 0)),
            ),
            compiler_params=pltpu.CompilerParams(
                dimension_semantics=("parallel",),
                vmem_limit_bytes=vmem_limit),
        )(xr, T, bias_row)
        out = out.reshape(N, Ho, Wo, Cout)
    else:
        # ---- channels-contraction fallback (large Cin/Cout) ------------------
        w_hwio = jnp.transpose(weight, (2, 3, 1, 0)).astype(dtype)    # (KH,KW,Cin,Cout)
        b2 = bias_vec.reshape(1, Cout)

        resident = KH * KW * Cin * Cout * isz + Cout * isz
        per_image = (2 * Hp * Wp * Cin + 2 * Ho * Wo * Cout) * isz + Ho * Wo * Cout * 4
        Nb = _pick_batch_block(N, per_image, max(block_vmem_budget - resident, per_image))

        kernel = functools.partial(_channels_kernel, KH=KH, KW=KW, stride=stride,
                                   Ho=Ho, Wo=Wo, scale=scale)
        out = pl.pallas_call(
            kernel,
            out_shape=jax.ShapeDtypeStruct((N, Ho * Wo, Cout), dtype),
            grid_spec=pltpu.PrefetchScalarGridSpec(
                num_scalar_prefetch=0,
                grid=(N // Nb,),
                in_specs=[
                    pl.BlockSpec((Nb, Hp, Wp, Cin), lambda b: (b, 0, 0, 0)),
                    pl.BlockSpec(memory_space=pltpu.MemorySpace.VMEM),
                    pl.BlockSpec(memory_space=pltpu.MemorySpace.VMEM),
                ],
                out_specs=pl.BlockSpec((Nb, Ho * Wo, Cout), lambda b: (b, 0, 0)),
            ),
            compiler_params=pltpu.CompilerParams(
                dimension_semantics=("parallel",),
                vmem_limit_bytes=vmem_limit),
        )(x, w_hwio, b2)
        out = out.reshape(N, Ho, Wo, Cout)

    return jnp.transpose(out, (0, 3, 1, 2))  # NHWC -> NCHW


# ----------------------------------------------------------------------------
# Demo / self-check
# ----------------------------------------------------------------------------
if __name__ == "__main__":
    # EqualConv2d(in_channel=4, out_channel=8, kernel_size=3, stride=1, padding=1, bias=True)
    N, Cin, H, W = 2, 4, 16, 16
    Cout, K = 8, 3
    stride, padding = 1, 1

    key = jax.random.PRNGKey(0)
    kx, kw = jax.random.split(key)
    x = jax.random.normal(kx, (N, Cin, H, W), jnp.float32)
    weight = jax.random.normal(kw, (Cout, Cin, K, K), jnp.float32)  # torch.randn init
    bias = jnp.zeros((Cout,), jnp.float32)                          # torch.zeros init

    out = equal_conv2d(x, weight, bias, stride=stride, padding=padding)
    out = jax.block_until_ready(out)

    # Reference (same math as F.conv2d with the equalized-lr scale).
    scale = 1.0 / math.sqrt(Cin * K * K)
    ref = jax.lax.conv_general_dilated(
        x, weight * scale,
        window_strides=(stride, stride),
        padding=[(padding, padding), (padding, padding)],
        dimension_numbers=("NCHW", "OIHW", "NCHW"),
    ) + bias.reshape(1, Cout, 1, 1)

    assert out.shape == (N, Cout, H, W)
    assert jnp.allclose(out, ref, atol=1e-4, rtol=1e-4)

    print("KERNEL_OK")
</pallas_src>

<mosaic_0001>
module attributes {stable_mosaic.version = 11 : i64} {
  func.func @_rowdense_kernel(%arg0: i32, %arg1: memref<2x18x72xf32, #tpu.memory_space<vmem>>, %arg2: memref<3x72x128xf32, #tpu.memory_space<vmem>>, %arg3: memref<1x128xf32, #tpu.memory_space<vmem>>, %arg4: memref<2x16x128xf32, #tpu.memory_space<vmem>>) attributes {dimension_semantics = [#tpu.dimension_semantics<parallel>], iteration_bounds = array<i64: 1>, scalar_prefetch = 0 : i64, scratch_operands = 0 : i64, tpu.core_type = #tpu.core_type<tc>, window_params = [{transform_indices = @transform_0, window_bounds = array<i64: 2, 18, 72>}, {pipeline_mode = #tpu.pipeline_mode<synchronous>, transform_indices = @transform_1, window_bounds = array<i64: 3, 72, 128>}, {pipeline_mode = #tpu.pipeline_mode<synchronous>, transform_indices = @transform_2, window_bounds = array<i64: 1, 128>}, {transform_indices = @transform_3, window_bounds = array<i64: 2, 16, 128>}]} {
    %cst = arith.constant 0.000000e+00 : f32
    %0 = vector.broadcast %cst : f32 to vector<32x128xf32>
    %c0 = arith.constant 0 : index
    %c0_0 = arith.constant 0 : index
    %c0_1 = arith.constant 0 : index
    %1 = vector.load %arg1[%c0, %c0_0, %c0_1] : memref<2x18x72xf32, #tpu.memory_space<vmem>>, vector<2x16x72xf32>
    %2 = vector.shape_cast %1 : vector<2x16x72xf32> to vector<32x72xf32>
    %c0_2 = arith.constant 0 : index
    %c0_3 = arith.constant 0 : index
    %c0_4 = arith.constant 0 : index
    %3 = vector.load %arg2[%c0_2, %c0_3, %c0_4] : memref<3x72x128xf32, #tpu.memory_space<vmem>>, vector<1x72x128xf32>
    %4 = vector.shape_cast %3 : vector<1x72x128xf32> to vector<72x128xf32>
    %cst_5 = arith.constant dense<0.000000e+00> : vector<32x128xf32>
    %5 = tpu.matmul %2, %4, %cst_5 {dimension_numbers = #tpu.dot_dimension_numbers<[1], [0], [0], [1], [0, 0, 1, 1], [], []>} : vector<32x72xf32>, vector<72x128xf32>, vector<32x128xf32> -> vector<32x128xf32>
    %6 = arith.addf %0, %5 : vector<32x128xf32>
    %c0_6 = arith.constant 0 : index
    %c1 = arith.constant 1 : index
    %c0_7 = arith.constant 0 : index
    %7 = vector.load %arg1[%c0_6, %c1, %c0_7] : memref<2x18x72xf32, #tpu.memory_space<vmem>>, vector<2x16x72xf32>
    %8 = vector.shape_cast %7 : vector<2x16x72xf32> to vector<32x72xf32>
    %c1_8 = arith.constant 1 : index
    %c0_9 = arith.constant 0 : index
    %c0_10 = arith.constant 0 : index
    %9 = vector.load %arg2[%c1_8, %c0_9, %c0_10] : memref<3x72x128xf32, #tpu.memory_space<vmem>>, vector<1x72x128xf32>
    %10 = vector.shape_cast %9 : vector<1x72x128xf32> to vector<72x128xf32>
    %cst_11 = arith.constant dense<0.000000e+00> : vector<32x128xf32>
    %11 = tpu.matmul %8, %10, %cst_11 {dimension_numbers = #tpu.dot_dimension_numbers<[1], [0], [0], [1], [0, 0, 1, 1], [], []>} : vector<32x72xf32>, vector<72x128xf32>, vector<32x128xf32> -> vector<32x128xf32>
    %12 = arith.addf %6, %11 : vector<32x128xf32>
    %c0_12 = arith.constant 0 : index
    %c2 = arith.constant 2 : index
    %c0_13 = arith.constant 0 : index
    %13 = vector.load %arg1[%c0_12, %c2, %c0_13] : memref<2x18x72xf32, #tpu.memory_space<vmem>>, vector<2x16x72xf32>
    %14 = vector.shape_cast %13 : vector<2x16x72xf32> to vector<32x72xf32>
    %c2_14 = arith.constant 2 : index
    %c0_15 = arith.constant 0 : index
    %c0_16 = arith.constant 0 : index
    %15 = vector.load %arg2[%c2_14, %c0_15, %c0_16] : memref<3x72x128xf32, #tpu.memory_space<vmem>>, vector<1x72x128xf32>
    %16 = vector.shape_cast %15 : vector<1x72x128xf32> to vector<72x128xf32>
    %cst_17 = arith.constant dense<0.000000e+00> : vector<32x128xf32>
    %17 = tpu.matmul %14, %16, %cst_17 {dimension_numbers = #tpu.dot_dimension_numbers<[1], [0], [0], [1], [0, 0, 1, 1], [], []>} : vector<32x72xf32>, vector<72x128xf32>, vector<32x128xf32> -> vector<32x128xf32>
    %18 = arith.addf %12, %17 : vector<32x128xf32>
    %cst_18 = arith.constant 0.166666672 : f32
    %19 = vector.broadcast %cst_18 : f32 to vector<32x128xf32>
    %20 = arith.mulf %18, %19 : vector<32x128xf32>
    %c0_19 = arith.constant 0 : index
    %c0_20 = arith.constant 0 : index
    %21 = vector.load %arg3[%c0_19, %c0_20] : memref<1x128xf32, #tpu.memory_space<vmem>>, vector<1x128xf32>
    %22 = vector.broadcast %21 : vector<1x128xf32> to vector<32x128xf32>
    %23 = arith.addf %20, %22 : vector<32x128xf32>
    %24 = vector.shape_cast %23 : vector<32x128xf32> to vector<2x16x128xf32>
    %c0_21 = arith.constant 0 : index
    %c0_22 = arith.constant 0 : index
    %c0_23 = arith.constant 0 : index
    %25 = vector.load %arg4[%c0_21, %c0_22, %c0_23] : memref<2x16x128xf32, #tpu.memory_space<vmem>>, vector<2x16x128xf32>
    tpu.vector_store %arg4[%c0_21, %c0_22, %c0_23], %24 {strides = array<i32>} : memref<2x16x128xf32, #tpu.memory_space<vmem>>, vector<2x16x128xf32>,
    return
  }
  func.func @transform_0(%arg0: i32) -> (i32, i32, i32) {
    %c0_i32 = arith.constant 0 : i32
    %c0_i32_0 = arith.constant 0 : i32
    %c0_i32_1 = arith.constant 0 : i32
    return %arg0, %c0_i32, %c0_i32_0 : i32, i32, i32
  }
  func.func @transform_1(%arg0: i32) -> (i32, i32, i32) {
    %c0_i32 = arith.constant 0 : i32
    %c0_i32_0 = arith.constant 0 : i32
    %c0_i32_1 = arith.constant 0 : i32
    %c0_i32_2 = arith.constant 0 : i32
    return %c0_i32, %c0_i32_0, %c0_i32_1 : i32, i32, i32
  }
  func.func @transform_2(%arg0: i32) -> (i32, i32) {
    %c0_i32 = arith.constant 0 : i32
    %c0_i32_0 = arith.constant 0 : i32
    %c0_i32_1 = arith.constant 0 : i32
    return %c0_i32, %c0_i32_0 : i32, i32
  }
  func.func @transform_3(%arg0: i32) -> (i32, i32, i32) {
    %c0_i32 = arith.constant 0 : i32
    %c0_i32_0 = arith.constant 0 : i32
    %c0_i32_1 = arith.constant 0 : i32
    return %arg0, %c0_i32, %c0_i32_0 : i32, i32, i32
  }
}

</mosaic_0001>

<llo_original>
// kernel: tpu_custom_call.1
$region0: #{tpu_custom_call.1}
  #allocation0 [shape = 'u32[]', space=smem, size = 0x4, offset = 0x4, fixed_abs, tag = 'smem constant byte address 0x4 - core index']
  #allocation1 [shape = 'u32[72,128]{1,0:T(1,128)}', space=vmem, size = 0x9000, scoped, tag = 'internal scratch']
  %s0 = inlined_call_operand.vmem [shape: f32[2,18,72], index: 0, kind: input, shape index: {}]
  %s1 = inlined_call_operand.hbm [shape: f32[3,72,128], index: 1, kind: input, shape index: {}]
  %s2 = inlined_call_operand.vmem [shape: f32[1,128], index: 2, kind: input, shape index: {}]
  %s3 = inlined_call_operand.hbm [shape: f32[2,16,128], index: 3, kind: output, shape index: {}]
  %s4 = sld [smem:[#allocation0]]
  $region26: #{tpu_custom_call.1} parent=0
    _
  %s6 = ssub.s32 1, %s4
  %s7 = scalar_select 0, %s6, %s4
  $region1: #{tpu_custom_call.1} parent=0
    #allocation2 [shape = 'u8[110592]{0}', space=vmem, size = 0x1b000, scoped, tag = 'input window, operand 1, single buffered']
    #allocation3 [shape = 's32[1]{0}', space=sflag, size = 0x4, scoped, tag = 'scoped memory for tpu_custom_call.1']
    #allocation4 [shape = 's32[1]{0}', space=sflag, size = 0x4, scoped, tag = 'scoped memory for tpu_custom_call.1']
    #allocation5 [shape = 'u8[16384]{0}', space=vmem, size = 0x4000, scoped, tag = 'output window, operand 0, single buffered']
    %8 = vsyncpa [#allocation3], 0
    %9 = vsyncpa [#allocation4], 0
    // Predicated region
    $region2: #{tpu_custom_call.1} parent=1 // pred_check
      _
    $region3: #{tpu_custom_call.1} parent=1 // pred_check_branch
      %11 = sbr.rel (0) target = $region5
    $region4: #{tpu_custom_call.1} parent=1 // pred_region
      _
    $region5: #{tpu_custom_call.1} parent=1 // pred_fallthru
      _
    // Predicated region
    $region6: #{tpu_custom_call.1} parent=1 // pred_check
      _
    $region7: #{tpu_custom_call.1} parent=1 // pred_check_branch
      %13 = sbr.rel (0) target = $region9
    $region8: #{tpu_custom_call.1} parent=1 // pred_region
      %15 = vsyncadd [#allocation3], 0
      %s16 = sshll.u32 %s1, 4
      %s17 = int_to_ptr.hbm [resolvable:$true] %s16
      %s18 = sshll.u32 [#allocation2], 4
      %s19 = int_to_ptr.vmem [resolvable:$true] %s18
      %24 = dma.hbm_to_vmem [thread:$0]  %s17, 3456, %s19, [#allocation3], 128, 128, 8
    $region9: #{tpu_custom_call.1} parent=1 // pred_fallthru
      _
    // Predicated region
    $region10: #{tpu_custom_call.1} parent=1 // pred_check
      _
    $region11: #{tpu_custom_call.1} parent=1 // pred_check_branch
      %26 = sbr.rel (0) target = $region13
    $region12: #{tpu_custom_call.1} parent=1 // pred_region
      _
    $region13: #{tpu_custom_call.1} parent=1 // pred_fallthru
      _
    // Predicated region
    $region14: #{tpu_custom_call.1} parent=1 // pred_check
      _
    $region15: #{tpu_custom_call.1} parent=1 // pred_check_branch
      %28 = sbr.rel (0) target = $region17
    $region16: #{tpu_custom_call.1} parent=1 // pred_region
      %30 = dma.done [#allocation3], 3456
    $region17: #{tpu_custom_call.1} parent=1 // pred_fallthru
      _
    %v31 = vld [vmem:[%s0] sm:$0xff]
    %v32 = vld [vmem:[%s0 + $0x8] sm:$0xff]
    %v33 = vld [vmem:[%s0 + $0x18] sm:$0xff]
    %v34 = vld [vmem:[%s0 + $0x20] sm:$0xff]
    %v35 = vld [vmem:[#allocation2] sm:$0xff]
    %v36 = vld [vmem:[#allocation2 + $0x8] sm:$0xff]
    %v37 = vld [vmem:[#allocation2 + $0x10] sm:$0xff]
    %v38 = vld [vmem:[#allocation2 + $0x18] sm:$0xff]
    %v39 = vld [vmem:[#allocation2 + $0x20] sm:$0xff]
    %v40 = vld [vmem:[#allocation2 + $0x28] sm:$0xff]
    %v41 = vld [vmem:[#allocation2 + $0x30] sm:$0xff]
    %v42 = vld [vmem:[#allocation2 + $0x38] sm:$0xff]
    %v43 = vld [vmem:[#allocation2 + $0x40] sm:$0xff]
    %v44 = vld [vmem:[%s0 + $0x1] sm:$0xff]
    %v45 = vld [vmem:[%s0 + $0x9] sm:$0xff]
    %v46 = vld [vmem:[%s0 + $0x19] sm:$0xff]
    %v47 = vld [vmem:[%s0 + $0x21] sm:$0xff]
    %s48 = scalar_lea.vmem [#allocation2], 72
    %v49 = vld [vmem:[%s48] sm:$0xff]
    %v50 = vld [vmem:[%s48 + $0x8] sm:$0xff]
    %v51 = vld [vmem:[%s48 + $0x10] sm:$0xff]
    %v52 = vld [vmem:[%s48 + $0x18] sm:$0xff]
    %v53 = vld [vmem:[%s48 + $0x20] sm:$0xff]
    %v54 = vld [vmem:[%s48 + $0x28] sm:$0xff]
    %v55 = vld [vmem:[%s48 + $0x30] sm:$0xff]
    %v56 = vld [vmem:[%s48 + $0x38] sm:$0xff]
    %v57 = vld [vmem:[%s48 + $0x40] sm:$0xff]
    %vm58 = vcmask 588800
    %v60 = vsel %vm58, %v44, 0
    %v63 = vsel %vm58, %v45, 0
    %v66 = vsel %vm58, %v46, 0
    %v69 = vsel %vm58, %v47, 0
    %71 = vmatpush.msra.mxu0 0.0
    %72 = vmatpush.msra.mxu0 0.0
    %73 = vmatpush.msra.mxu0 0.0
    %74 = vmatpush.msra.mxu0 0.0
    %75 = vmatpush.msra.mxu0 0.0
    %76 = vmatpush.msra.mxu0 0.0
    %77 = vmatpush.msra.mxu0 0.0
    %78 = vmatpush.msra.mxu0 %v57
    %79 = vmatpush.msra.mxu0 %v56
    %80 = vmatpush.msra.mxu0 %v55
    %81 = vmatpush.msra.mxu0 %v54
    %82 = vmatpush.msra.mxu0 %v53
    %83 = vmatpush.msra.mxu0 %v52
    %84 = vmatpush.msra.mxu0 %v51
    %85 = vmatpush.msra.mxu0 %v50
    %86 = vmatpush.msra.mxu0 %v49
    %87 = vmatmul.f32.gmra.mxu0 %v60
    %v88 = vpop.f32.mrf.mxu0
    %v89 = vadd.f32 0.0, %v88
    %90 = vmatmul.f32.gmra.mxu0 %v63
    %v91 = vpop.f32.mrf.mxu0
    %v92 = vadd.f32 0.0, %v91
    %93 = vmatmul.f32.gmra.mxu0 %v66
    %v94 = vpop.f32.mrf.mxu0
    %v95 = vadd.f32 0.0, %v94
    %96 = vmatmul.f32.gmra.mxu0 %v69
    %v97 = vpop.f32.mrf.mxu0
    %v98 = vadd.f32 0.0, %v97
    %99 = vdwg.mxu0
    %v101 = vsel %vm58, %v31, 0
    %v104 = vsel %vm58, %v32, 0
    %v107 = vsel %vm58, %v33, 0
    %v110 = vsel %vm58, %v34, 0
    %112 = vmatpush.msra.mxu0 0.0
    %113 = vmatpush.msra.mxu0 0.0
    %114 = vmatpush.msra.mxu0 0.0
    %115 = vmatpush.msra.mxu0 0.0
    %116 = vmatpush.msra.mxu0 0.0
    %117 = vmatpush.msra.mxu0 0.0
    %118 = vmatpush.msra.mxu0 0.0
    %119 = vmatpush.msra.mxu0 %v43
    %120 = vmatpush.msra.mxu0 %v42
    %121 = vmatpush.msra.mxu0 %v41
    %122 = vmatpush.msra.mxu0 %v40
    %123 = vmatpush.msra.mxu0 %v39
    %124 = vmatpush.msra.mxu0 %v38
    %125 = vmatpush.msra.mxu0 %v37
    %126 = vmatpush.msra.mxu0 %v36
    %127 = vmatpush.msra.mxu0 %v35
    %128 = vmatmul.f32.gmra.mxu0 %v101
    %v129 = vpop.f32.mrf.mxu0
    %v130 = vadd.f32 %v89, %v129
    %131 = vmatmul.f32.gmra.mxu0 %v104
    %v132 = vpop.f32.mrf.mxu0
    %v133 = vadd.f32 %v92, %v132
    %134 = vmatmul.f32.gmra.mxu0 %v107
    %v135 = vpop.f32.mrf.mxu0
    %v136 = vadd.f32 %v95, %v135
    %137 = vmatmul.f32.gmra.mxu0 %v110
    %v138 = vpop.f32.mrf.mxu0
    %v139 = vadd.f32 %v98, %v138
    %140 = vdwg.mxu0
    %v141 = vld [vmem:[%s0 + $0x2] sm:$0xff]
    %v142 = vld [vmem:[%s0 + $0xa] sm:$0xff]
    %v143 = vld [vmem:[%s0 + $0x1a] sm:$0xff]
    %v144 = vld [vmem:[%s0 + $0x22] sm:$0xff]
    %s145 = scalar_lea.vmem [#allocation2], 144
    %v146 = vld [vmem:[%s145] sm:$0xff]
    %v147 = vld [vmem:[%s145 + $0x8] sm:$0xff]
    %v148 = vld [vmem:[%s145 + $0x10] sm:$0xff]
    %v149 = vld [vmem:[%s145 + $0x18] sm:$0xff]
    %v150 = vld [vmem:[%s145 + $0x20] sm:$0xff]
    %v151 = vld [vmem:[%s145 + $0x28] sm:$0xff]
    %v152 = vld [vmem:[%s145 + $0x30] sm:$0xff]
    %v153 = vld [vmem:[%s145 + $0x38] sm:$0xff]
    %v154 = vld [vmem:[%s145 + $0x40] sm:$0xff]
    %v156 = vsel %vm58, %v141, 0
    %v159 = vsel %vm58, %v142, 0
    %v162 = vsel %vm58, %v143, 0
    %v165 = vsel %vm58, %v144, 0
    %167 = vmatpush.msra.mxu0 0.0
    %168 = vmatpush.msra.mxu0 0.0
    %169 = vmatpush.msra.mxu0 0.0
    %170 = vmatpush.msra.mxu0 0.0
    %171 = vmatpush.msra.mxu0 0.0
    %172 = vmatpush.msra.mxu0 0.0
    %173 = vmatpush.msra.mxu0 0.0
    %174 = vmatpush.msra.mxu0 %v154
    %175 = vmatpush.msra.mxu0 %v153
    %176 = vmatpush.msra.mxu0 %v152
    %177 = vmatpush.msra.mxu0 %v151
    %178 = vmatpush.msra.mxu0 %v150
    %179 = vmatpush.msra.mxu0 %v149
    %180 = vmatpush.msra.mxu0 %v148
    %181 = vmatpush.msra.mxu0 %v147
    %182 = vmatpush.msra.mxu0 %v146
    %183 = vmatmul.f32.gmra.mxu0 %v156
    %v184 = vpop.f32.mrf.mxu0
    %v185 = vadd.f32 0.0, %v184
    %186 = vmatmul.f32.gmra.mxu0 %v159
    %v187 = vpop.f32.mrf.mxu0
    %v188 = vadd.f32 0.0, %v187
    %189 = vmatmul.f32.gmra.mxu0 %v162
    %v190 = vpop.f32.mrf.mxu0
    %v191 = vadd.f32 0.0, %v190
    %192 = vmatmul.f32.gmra.mxu0 %v165
    %v193 = vpop.f32.mrf.mxu0
    %v194 = vadd.f32 0.0, %v193
    %195 = vdwg.mxu0
    %v196 = vadd.f32 %v130, %v185
    %v197 = vadd.f32 %v133, %v188
    %v198 = vadd.f32 %v136, %v191
    %v199 = vadd.f32 %v139, %v194
    %v200 = vmul.f32 %v196, 0.16666667
    %v201 = vmul.f32 %v197, 0.16666667
    %v202 = vmul.f32 %v198, 0.16666667
    %v203 = vmul.f32 %v199, 0.16666667
    %v204 = vld [vmem:[%s2] sm:$0x1]
    %v206 = vperm.slane %v204, 0
    %v208 = vadd.f32 %v200, %v206
    %v209 = vadd.f32 %v201, %v206
    %v210 = vadd.f32 %v202, %v206
    %v211 = vadd.f32 %v203, %v206
    %212 = vst [vmem:[#allocation5] sm:$0xff] %v208
    %213 = vst [vmem:[#allocation5 + $0x8] sm:$0xff] %v209
    %214 = vst [vmem:[#allocation5 + $0x10] sm:$0xff] %v210
    %215 = vst [vmem:[#allocation5 + $0x18] sm:$0xff] %v211
    // Predicated region
    $region18: #{tpu_custom_call.1} parent=1 // pred_check
      _
    $region19: #{tpu_custom_call.1} parent=1 // pred_check_branch
      %217 = sbr.rel (0) target = $region21
    $region20: #{tpu_custom_call.1} parent=1 // pred_region
      %219 = vsyncadd [#allocation4], 0
      %s220 = sshll.u32 [#allocation5], 4
      %s221 = int_to_ptr.vmem [resolvable:$true] %s220
      %s222 = sshll.u32 %s3, 4
      %s223 = int_to_ptr.hbm [resolvable:$true] %s222
      %228 = dma.vmem_to_hbm [thread:$0]  %s221, 512, %s223, [#allocation4], 128, 128, 8
    $region21: #{tpu_custom_call.1} parent=1 // pred_fallthru
      _
    // Predicated region
    $region22: #{tpu_custom_call.1} parent=1 // pred_check
      _
    $region23: #{tpu_custom_call.1} parent=1 // pred_check_branch
      %230 = sbr.rel (0) target = $region25
    $region24: #{tpu_custom_call.1} parent=1 // pred_region
      %232 = dma.done [#allocation4], 512
    $region25: #{tpu_custom_call.1} parent=1 // pred_fallthru
      _
    %233 = vsyncpa [#allocation3], 1
    %234 = vsyncpa [#allocation4], 1

</llo_original>
